<compile_context>
chip_gen: v7x
topology: tpu7x:2x2x1
jax: 0.10.0
libtpu: 0.0.40
codegen_flags: <defaults>
</compile_context>

<pallas_src>
import jax
import jax.numpy as jnp
from jax.experimental import pallas as pl
from jax.experimental.pallas import tpu as pltpu

# ------------------------- problem sizes (small, synthetic) -------------------
B = 2            # batch
C_IN = 4         # input channels
H = W = 16       # spatial
HID = 32         # encoder output channels (latent dim)
NUM_CLASSES = 10
KH = KW = 3

HW = H * W                   # 256
BHW = B * HW                 # 512
CK = C_IN * KH * KW          # 36
LANE = 128                   # lane width; pad small dims to one full vreg
CKP = LANE                   # padded patch-feature dim
HIDP = LANE                  # padded hidden dim
NCP = LANE                   # padded class dim


# ------------------------------ Pallas kernel ---------------------------------
def base_model_kernel(patch_ref, wconv_ref, bconv_ref, pool_ref,
                      wcls_ref, bcls_ref, z_ref, logits_ref):
    # patch_ref : (BHW, CKP)   bf16  im2col patches (batch folded), lane-padded
    # wconv_ref : (CKP, HIDP)  bf16  flattened conv weight, zero-padded
    # bconv_ref : (1, HIDP)    f32   conv bias (zero-padded)
    # pool_ref  : (B, BHW)     bf16  block-diagonal average-pooling matrix (1/HW)
    # wcls_ref  : (HIDP, NCP)  bf16  classifier weight, zero-padded
    # bcls_ref  : (1, NCP)     f32   classifier bias (zero-padded)
    # z_ref     : (B, HIDP)    f32   pooled features (cols >= HID are exactly 0)
    # logits_ref: (B, NCP)     f32   logits (cols >= NUM_CLASSES are exactly 0)

    # conv2d (3x3, pad 1) as a single MXU matmul over folded batch, f32 accumulate
    feat = jnp.dot(patch_ref[...], wconv_ref[...],
                   preferred_element_type=jnp.float32)         # (BHW, HIDP) f32
    feat = jnp.maximum(feat + bconv_ref[...], 0.0)             # bias + ReLU (VPU, f32)

    # global average pool as a matmul -> rides the MXU instead of XLU reduction
    z = jnp.dot(pool_ref[...], feat.astype(jnp.bfloat16),
                preferred_element_type=jnp.float32)            # (B, HIDP) f32
    z_ref[...] = z                                             # lane-dense store

    # linear classifier
    logits = jnp.dot(z.astype(jnp.bfloat16), wcls_ref[...],
                     preferred_element_type=jnp.float32)       # (B, NCP) f32
    logits_ref[...] = logits + bcls_ref[...]                   # lane-dense store


# ------------------------------ JAX glue ---------------------------------------
def _im2col_nhwc(x):
    """x: (B, C, H, W) NCHW -> patches (B*H*W, CK), feature order (kh, kw, c)."""
    x_nhwc = jnp.transpose(x, (0, 2, 3, 1))                        # (B, H, W, C) - 8 KB
    xp = jnp.pad(x_nhwc, ((0, 0), (1, 1), (1, 1), (0, 0)))
    taps = [xp[:, di:di + H, dj:dj + W, :]
            for di in range(KH) for dj in range(KW)]
    patches = jnp.concatenate(taps, axis=-1)                       # (B, H, W, KH*KW*C)
    return patches.reshape(BHW, CK)                                # rows ordered (b, h, w)


def base_model_forward(x, params):
    """Forward pass equivalent to the concrete BaseModel: (logits, (z, logits))."""
    w_conv, b_conv, w_cls, b_cls = params

    # --- im2col patches, lane-padded, bf16 MXU operand -------------------------
    patches = _im2col_nhwc(x)
    patches = jnp.pad(patches, ((0, 0), (0, CKP - CK))).astype(jnp.bfloat16)

    # conv weight (HID, C, KH, KW) -> (KH*KW*C, HID); same (kh, kw, c) order as patches
    w_conv_flat = jnp.transpose(w_conv, (2, 3, 1, 0)).reshape(CK, HID)
    w_conv_pad = jnp.pad(w_conv_flat,
                         ((0, CKP - CK), (0, HIDP - HID))).astype(jnp.bfloat16)
    b_conv_pad = jnp.pad(b_conv, (0, HIDP - HID)).reshape(1, HIDP).astype(jnp.float32)

    # block-diagonal average-pooling matrix; 1/HW = 1/256 is exact in bf16
    pool = (jnp.repeat(jnp.eye(B, dtype=jnp.float32), HW, axis=1) / HW
            ).astype(jnp.bfloat16)                                  # (B, BHW)

    # classifier weight / bias, lane-padded
    w_cls_pad = jnp.pad(w_cls, ((0, HIDP - HID),
                                (0, NCP - NUM_CLASSES))).astype(jnp.bfloat16)
    b_cls_pad = jnp.pad(b_cls, (0, NCP - NUM_CLASSES)).reshape(1, NCP).astype(jnp.float32)

    flops = 2 * (BHW * CKP * HIDP + B * BHW * HIDP + B * HIDP * NCP)
    bytes_accessed = (
        2 * (patches.size + w_conv_pad.size + pool.size + w_cls_pad.size)   # bf16 inputs
        + 4 * (b_conv_pad.size + b_cls_pad.size + 2 * B * LANE))            # f32 in/out

    vmem = pl.BlockSpec(memory_space=pltpu.MemorySpace.VMEM)
    z_pad, logits_pad = pl.pallas_call(
        base_model_kernel,
        out_shape=(jax.ShapeDtypeStruct((B, HIDP), jnp.float32),
                   jax.ShapeDtypeStruct((B, NCP), jnp.float32)),
        in_specs=[vmem, vmem, vmem, vmem, vmem, vmem],
        out_specs=(vmem, vmem),
        cost_estimate=pl.CostEstimate(flops=flops, transcendentals=0,
                                      bytes_accessed=bytes_accessed),
    )(patches, w_conv_pad, b_conv_pad, pool, w_cls_pad, b_cls_pad)

    z = z_pad[:, :HID]
    logits = logits_pad[:, :NUM_CLASSES]
    return logits, (z, logits)


def reference_forward(x, params):
    """Plain-XLA reference (f32) used only for a numerical self-check."""
    w_conv, b_conv, w_cls, b_cls = params
    y = jax.lax.conv_general_dilated(
        x, w_conv, window_strides=(1, 1), padding=((1, 1), (1, 1)),
        dimension_numbers=("NCHW", "OIHW", "NCHW"))
    y = jax.nn.relu(y + b_conv[None, :, None, None])
    z = jnp.mean(y, axis=(2, 3))
    logits = z @ w_cls + b_cls
    return logits, (z, logits)


def init_params(key):
    k1, k2, k3, k4 = jax.random.split(key, 4)
    w_conv = jax.random.normal(k1, (HID, C_IN, KH, KW), jnp.float32) * 0.1
    b_conv = jax.random.normal(k2, (HID,), jnp.float32) * 0.01
    w_cls = jax.random.normal(k3, (HID, NUM_CLASSES), jnp.float32) * 0.1
    b_cls = jax.random.normal(k4, (NUM_CLASSES,), jnp.float32) * 0.01
    return w_conv, b_conv, w_cls, b_cls


# ------------------------------ main --------------------------------------------
if __name__ == "__main__":
    key = jax.random.PRNGKey(0)
    kx, kp = jax.random.split(key)
    x = jax.random.normal(kx, (B, C_IN, H, W), jnp.float32)   # NCHW, like PyTorch
    params = init_params(kp)

    logits, aux = jax.jit(base_model_forward)(x, params)
    jax.block_until_ready((logits, aux))

    z, _ = aux
    assert logits.shape == (B, NUM_CLASSES)
    assert z.shape == (B, HID)

    # numerical self-check vs plain-XLA reference (loose tol: bf16 MXU operands)
    ref_logits, (ref_z, _) = reference_forward(x, params)
    assert jnp.allclose(logits, ref_logits, atol=5e-2, rtol=5e-2), "logits mismatch"
    assert jnp.allclose(z, ref_z, atol=5e-2, rtol=5e-2), "z mismatch"

    print("KERNEL_OK")
</pallas_src>

<mosaic_0001>
module attributes {stable_mosaic.version = 11 : i64} {
  func.func @base_model_kernel(%arg0: memref<512x128xbf16, #tpu.memory_space<vmem>>, %arg1: memref<128x128xbf16, #tpu.memory_space<vmem>>, %arg2: memref<1x128xf32, #tpu.memory_space<vmem>>, %arg3: memref<2x512xbf16, #tpu.memory_space<vmem>>, %arg4: memref<128x128xbf16, #tpu.memory_space<vmem>>, %arg5: memref<1x128xf32, #tpu.memory_space<vmem>>, %arg6: memref<2x128xf32, #tpu.memory_space<vmem>>, %arg7: memref<2x128xf32, #tpu.memory_space<vmem>>) attributes {dimension_semantics = [], scalar_prefetch = 0 : i64, scratch_operands = 0 : i64, tpu.core_type = #tpu.core_type<tc>} {
    %c0 = arith.constant 0 : index
    %c0_0 = arith.constant 0 : index
    %0 = vector.load %arg0[%c0, %c0_0] : memref<512x128xbf16, #tpu.memory_space<vmem>>, vector<512x128xbf16>
    %c0_1 = arith.constant 0 : index
    %c0_2 = arith.constant 0 : index
    %1 = vector.load %arg1[%c0_1, %c0_2] : memref<128x128xbf16, #tpu.memory_space<vmem>>, vector<128x128xbf16>
    %cst = arith.constant dense<0.000000e+00> : vector<512x128xf32>
    %2 = tpu.matmul %0, %1, %cst {dimension_numbers = #tpu.dot_dimension_numbers<[1], [0], [0], [1], [0, 0, 1, 1], [], []>} : vector<512x128xbf16>, vector<128x128xbf16>, vector<512x128xf32> -> vector<512x128xf32>
    %c0_3 = arith.constant 0 : index
    %c0_4 = arith.constant 0 : index
    %3 = vector.load %arg2[%c0_3, %c0_4] : memref<1x128xf32, #tpu.memory_space<vmem>>, vector<1x128xf32>
    %4 = vector.broadcast %3 : vector<1x128xf32> to vector<512x128xf32>
    %5 = arith.addf %2, %4 : vector<512x128xf32>
    %cst_5 = arith.constant 0.000000e+00 : f32
    %6 = vector.broadcast %cst_5 : f32 to vector<512x128xf32>
    %7 = arith.maximumf %5, %6 : vector<512x128xf32>
    %c0_6 = arith.constant 0 : index
    %c0_7 = arith.constant 0 : index
    %8 = vector.load %arg3[%c0_6, %c0_7] : memref<2x512xbf16, #tpu.memory_space<vmem>>, vector<2x512xbf16>
    %9 = arith.truncf %7 : vector<512x128xf32> to vector<512x128xbf16>
    %cst_8 = arith.constant dense<0.000000e+00> : vector<2x128xf32>
    %10 = tpu.matmul %8, %9, %cst_8 {dimension_numbers = #tpu.dot_dimension_numbers<[1], [0], [0], [1], [0, 0, 1, 1], [], []>} : vector<2x512xbf16>, vector<512x128xbf16>, vector<2x128xf32> -> vector<2x128xf32>
    %c0_9 = arith.constant 0 : index
    %c0_10 = arith.constant 0 : index
    %11 = vector.load %arg6[%c0_9, %c0_10] : memref<2x128xf32, #tpu.memory_space<vmem>>, vector<2x128xf32>
    tpu.vector_store %arg6[%c0_9, %c0_10], %10 {strides = array<i32>} : memref<2x128xf32, #tpu.memory_space<vmem>>, vector<2x128xf32>,
    %12 = arith.truncf %10 : vector<2x128xf32> to vector<2x128xbf16>
    %c0_11 = arith.constant 0 : index
    %c0_12 = arith.constant 0 : index
    %13 = vector.load %arg4[%c0_11, %c0_12] : memref<128x128xbf16, #tpu.memory_space<vmem>>, vector<128x128xbf16>
    %cst_13 = arith.constant dense<0.000000e+00> : vector<2x128xf32>
    %14 = tpu.matmul %12, %13, %cst_13 {dimension_numbers = #tpu.dot_dimension_numbers<[1], [0], [0], [1], [0, 0, 1, 1], [], []>} : vector<2x128xbf16>, vector<128x128xbf16>, vector<2x128xf32> -> vector<2x128xf32>
    %c0_14 = arith.constant 0 : index
    %c0_15 = arith.constant 0 : index
    %15 = vector.load %arg5[%c0_14, %c0_15] : memref<1x128xf32, #tpu.memory_space<vmem>>, vector<1x128xf32>
    %16 = vector.broadcast %15 : vector<1x128xf32> to vector<2x128xf32>
    %17 = arith.addf %14, %16 : vector<2x128xf32>
    %c0_16 = arith.constant 0 : index
    %c0_17 = arith.constant 0 : index
    %18 = vector.load %arg7[%c0_16, %c0_17] : memref<2x128xf32, #tpu.memory_space<vmem>>, vector<2x128xf32>
    tpu.vector_store %arg7[%c0_16, %c0_17], %17 {strides = array<i32>} : memref<2x128xf32, #tpu.memory_space<vmem>>, vector<2x128xf32>,
    return
  }
}

</mosaic_0001>

<llo_original>
// kernel: base_model_forward.1
$region0: #{base_model_forward.1}
  #allocation0 [shape = 'u32[]', space=smem, size = 0x4, offset = 0x4, fixed_abs, tag = 'smem constant byte address 0x4 - core index']
  #allocation1 [shape = 'u32[144,128]{1,0:T(1,128)}', space=vmem, size = 0x12000, scoped, tag = 'internal scratch']
  %s0 = inlined_call_operand.vmem [shape: bf16[512,128], index: 0, kind: input, shape index: {}]
  %s1 = inlined_call_operand.vmem [shape: bf16[128,128], index: 1, kind: input, shape index: {}]
  %s2 = inlined_call_operand.vmem [shape: f32[1,128], index: 2, kind: input, shape index: {}]
  %s3 = inlined_call_operand.vmem [shape: bf16[2,512], index: 3, kind: input, shape index: {}]
  %s4 = inlined_call_operand.vmem [shape: bf16[128,128], index: 4, kind: input, shape index: {}]
  %s5 = inlined_call_operand.vmem [shape: f32[1,128], index: 5, kind: input, shape index: {}]
  %s6 = inlined_call_operand.hbm [shape: f32[2,128], index: 6, kind: output, shape index: {0}]
  %s7 = inlined_call_operand.vmem [shape: f32[2,128], index: 7, kind: output, shape index: {1}]
  %8 = xla_tuple %s6, %s7
  %s9 = sld [smem:[#allocation0]]
  $region42: #{base_model_forward.1} parent=0
    _
  %s11 = ssub.s32 1, %s9
  %s12 = scalar_select 0, %s11, %s9
  $region1: #{base_model_forward.1} parent=0
    #allocation2 [shape = 'u8[1024]{0}', space=vmem, size = 0x400, scoped, tag = 'output window, operand 0, single buffered']
    #allocation3 [shape = 's32[1]{0}', space=sflag, size = 0x4, scoped, tag = 'scoped memory for base_model_forward.1']
    %13 = vsyncpa [#allocation3], 0
    // Predicated region
    $region2: #{base_model_forward.1} parent=1 // pred_check
      _
    $region3: #{base_model_forward.1} parent=1 // pred_check_branch
      %15 = sbr.rel (0) target = $region5
    $region4: #{base_model_forward.1} parent=1 // pred_region
      _
    $region5: #{base_model_forward.1} parent=1 // pred_fallthru
      _
    // Predicated region
    $region6: #{base_model_forward.1} parent=1 // pred_check
      _
    $region7: #{base_model_forward.1} parent=1 // pred_check_branch
      %17 = sbr.rel (0) target = $region9
    $region8: #{base_model_forward.1} parent=1 // pred_region
      _
    $region9: #{base_model_forward.1} parent=1 // pred_fallthru
      _
    // Predicated region
    $region10: #{base_model_forward.1} parent=1 // pred_check
      _
    $region11: #{base_model_forward.1} parent=1 // pred_check_branch
      %19 = sbr.rel (0) target = $region13
    $region12: #{base_model_forward.1} parent=1 // pred_region
      _
    $region13: #{base_model_forward.1} parent=1 // pred_fallthru
      _
    // Predicated region
    $region14: #{base_model_forward.1} parent=1 // pred_check
      _
    $region15: #{base_model_forward.1} parent=1 // pred_check_branch
      %21 = sbr.rel (0) target = $region17
    $region16: #{base_model_forward.1} parent=1 // pred_region
      _
    $region17: #{base_model_forward.1} parent=1 // pred_fallthru
      _
    // Predicated region
    $region18: #{base_model_forward.1} parent=1 // pred_check
      _
    $region19: #{base_model_forward.1} parent=1 // pred_check_branch
      %23 = sbr.rel (0) target = $region21
    $region20: #{base_model_forward.1} parent=1 // pred_region
      _
    $region21: #{base_model_forward.1} parent=1 // pred_fallthru
      _
    // Predicated region
    $region22: #{base_model_forward.1} parent=1 // pred_check
      _
    $region23: #{base_model_forward.1} parent=1 // pred_check_branch
      %25 = sbr.rel (0) target = $region25
    $region24: #{base_model_forward.1} parent=1 // pred_region
      _
    $region25: #{base_model_forward.1} parent=1 // pred_fallthru
      _
    %v27 = vld [vmem:[%s0] sm:$0xf]
    %v28 = vld [vmem:[%s0 + $0x4] sm:$0xf]
    %v29 = vld [vmem:[%s0 + $0x8] sm:$0xf]
    %v30 = vld [vmem:[%s0 + $0xc] sm:$0xf]
    %v31 = vld [vmem:[%s0 + $0x10] sm:$0xf]
    %v32 = vld [vmem:[%s0 + $0x14] sm:$0xf]
    %v33 = vld [vmem:[%s0 + $0x18] sm:$0xf]
    %v34 = vld [vmem:[%s0 + $0x1c] sm:$0xf]
    %v35 = vld [vmem:[%s0 + $0x20] sm:$0xf]
    %v36 = vld [vmem:[%s0 + $0x24] sm:$0xf]
    %v37 = vld [vmem:[%s0 + $0x28] sm:$0xf]
    %v38 = vld [vmem:[%s0 + $0x2c] sm:$0xf]
    %v39 = vld [vmem:[%s0 + $0x30] sm:$0xf]
    %v40 = vld [vmem:[%s0 + $0x34] sm:$0xf]
    %v41 = vld [vmem:[%s0 + $0x38] sm:$0xf]
    %v42 = vld [vmem:[%s0 + $0x3c] sm:$0xf]
    %v43 = vld [vmem:[%s0 + $0x40] sm:$0xf]
    %v44 = vld [vmem:[%s0 + $0x44] sm:$0xf]
    %v45 = vld [vmem:[%s0 + $0x48] sm:$0xf]
    %v46 = vld [vmem:[%s0 + $0x4c] sm:$0xf]
    %v47 = vld [vmem:[%s0 + $0x50] sm:$0xf]
    %v48 = vld [vmem:[%s0 + $0x54] sm:$0xf]
    %v49 = vld [vmem:[%s0 + $0x58] sm:$0xf]
    %v50 = vld [vmem:[%s0 + $0x5c] sm:$0xf]
    %v51 = vld [vmem:[%s0 + $0x60] sm:$0xf]
    %v52 = vld [vmem:[%s0 + $0x64] sm:$0xf]
    %v53 = vld [vmem:[%s0 + $0x68] sm:$0xf]
    %v54 = vld [vmem:[%s0 + $0x6c] sm:$0xf]
    %v55 = vld [vmem:[%s0 + $0x70] sm:$0xf]
    %v56 = vld [vmem:[%s0 + $0x74] sm:$0xf]
    %v57 = vld [vmem:[%s0 + $0x78] sm:$0xf]
    %v58 = vld [vmem:[%s0 + $0x7c] sm:$0xf]
    %v59 = vld [vmem:[%s0 + $0x80] sm:$0xf]
    %v60 = vld [vmem:[%s0 + $0x84] sm:$0xf]
    %v61 = vld [vmem:[%s0 + $0x88] sm:$0xf]
    %v62 = vld [vmem:[%s0 + $0x8c] sm:$0xf]
    %v63 = vld [vmem:[%s0 + $0x90] sm:$0xf]
    %v64 = vld [vmem:[%s0 + $0x94] sm:$0xf]
    %v65 = vld [vmem:[%s0 + $0x98] sm:$0xf]
    %v66 = vld [vmem:[%s0 + $0x9c] sm:$0xf]
    %v67 = vld [vmem:[%s0 + $0xa0] sm:$0xf]
    %v68 = vld [vmem:[%s0 + $0xa4] sm:$0xf]
    %v69 = vld [vmem:[%s0 + $0xa8] sm:$0xf]
    %v70 = vld [vmem:[%s0 + $0xac] sm:$0xf]
    %v71 = vld [vmem:[%s0 + $0xb0] sm:$0xf]
    %v72 = vld [vmem:[%s0 + $0xb4] sm:$0xf]
    %v73 = vld [vmem:[%s0 + $0xb8] sm:$0xf]
    %v74 = vld [vmem:[%s0 + $0xbc] sm:$0xf]
    %v75 = vld [vmem:[%s0 + $0xc0] sm:$0xf]
    %v76 = vld [vmem:[%s0 + $0xc4] sm:$0xf]
    %v77 = vld [vmem:[%s0 + $0xc8] sm:$0xf]
    %v78 = vld [vmem:[%s0 + $0xcc] sm:$0xf]
    %v79 = vld [vmem:[%s0 + $0xd0] sm:$0xf]
    %v80 = vld [vmem:[%s0 + $0xd4] sm:$0xf]
    %v81 = vld [vmem:[%s0 + $0xd8] sm:$0xf]
    %v82 = vld [vmem:[%s0 + $0xdc] sm:$0xf]
    %v83 = vld [vmem:[%s0 + $0xe0] sm:$0xf]
    %v84 = vld [vmem:[%s0 + $0xe4] sm:$0xf]
    %v85 = vld [vmem:[%s0 + $0xe8] sm:$0xf]
    %v86 = vld [vmem:[%s0 + $0xec] sm:$0xf]
    %v87 = vld [vmem:[%s0 + $0xf0] sm:$0xf]
    %v88 = vld [vmem:[%s0 + $0xf4] sm:$0xf]
    %v89 = vld [vmem:[%s0 + $0xf8] sm:$0xf]
    %v90 = vld [vmem:[%s0 + $0xfc] sm:$0xf]
    %v91 = vld [vmem:[%s1] sm:$0xf]
    %v92 = vld [vmem:[%s1 + $0x4] sm:$0xf]
    %v93 = vld [vmem:[%s1 + $0x8] sm:$0xf]
    %v94 = vld [vmem:[%s1 + $0xc] sm:$0xf]
    %v95 = vld [vmem:[%s1 + $0x10] sm:$0xf]
    %v96 = vld [vmem:[%s1 + $0x14] sm:$0xf]
    %v97 = vld [vmem:[%s1 + $0x18] sm:$0xf]
    %v98 = vld [vmem:[%s1 + $0x1c] sm:$0xf]
    %v99 = vld [vmem:[%s1 + $0x20] sm:$0xf]
    %v100 = vld [vmem:[%s1 + $0x24] sm:$0xf]
    %v101 = vld [vmem:[%s1 + $0x28] sm:$0xf]
    %v102 = vld [vmem:[%s1 + $0x2c] sm:$0xf]
    %v103 = vld [vmem:[%s1 + $0x30] sm:$0xf]
    %v104 = vld [vmem:[%s1 + $0x34] sm:$0xf]
    %v105 = vld [vmem:[%s1 + $0x38] sm:$0xf]
    %v106 = vld [vmem:[%s1 + $0x3c] sm:$0xf]
    %v107 = vld [vmem:[%s2] sm:$0x1]
    %v109 = vlaneseq
    %v110 = vshrl.u32 %v109, 7
    %v111 = vsub.s32 0, %v110
    %v112 = vrot.slane %v107, %v111
    %v178 = vunpack.c.l.b16 %v27
    %v179 = vunpack.c.l.b16 %v28
    %v180 = vunpack.c.l.b16 %v29
    %v181 = vunpack.c.l.b16 %v30
    %v182 = vunpack.c.l.b16 %v31
    %v183 = vunpack.c.l.b16 %v32
    %v184 = vunpack.c.l.b16 %v33
    %v185 = vunpack.c.l.b16 %v34
    %v186 = vunpack.c.l.b16 %v35
    %v187 = vunpack.c.l.b16 %v36
    %v188 = vunpack.c.l.b16 %v37
    %v189 = vunpack.c.l.b16 %v38
    %v190 = vunpack.c.l.b16 %v39
    %v191 = vunpack.c.l.b16 %v40
    %v192 = vunpack.c.l.b16 %v41
    %v193 = vunpack.c.l.b16 %v42
    %v194 = vunpack.c.l.b16 %v43
    %v195 = vunpack.c.l.b16 %v44
    %v196 = vunpack.c.l.b16 %v45
    %v197 = vunpack.c.l.b16 %v46
    %v198 = vunpack.c.l.b16 %v47
    %v199 = vunpack.c.l.b16 %v48
    %v200 = vunpack.c.l.b16 %v49
    %v201 = vunpack.c.l.b16 %v50
    %v202 = vunpack.c.l.b16 %v51
    %v203 = vunpack.c.l.b16 %v52
    %v204 = vunpack.c.l.b16 %v53
    %v205 = vunpack.c.l.b16 %v54
    %v206 = vunpack.c.l.b16 %v55
    %v207 = vunpack.c.l.b16 %v56
    %v208 = vunpack.c.l.b16 %v57
    %v209 = vunpack.c.l.b16 %v58
    %v210 = vunpack.c.l.b16 %v59
    %v211 = vunpack.c.l.b16 %v60
    %v212 = vunpack.c.l.b16 %v61
    %v213 = vunpack.c.l.b16 %v62
    %v214 = vunpack.c.l.b16 %v63
    %v215 = vunpack.c.l.b16 %v64
    %v216 = vunpack.c.l.b16 %v65
    %v217 = vunpack.c.l.b16 %v66
    %v218 = vunpack.c.l.b16 %v67
    %v219 = vunpack.c.l.b16 %v68
    %v220 = vunpack.c.l.b16 %v69
    %v221 = vunpack.c.l.b16 %v70
    %v222 = vunpack.c.l.b16 %v71
    %v223 = vunpack.c.l.b16 %v72
    %v224 = vunpack.c.l.b16 %v73
    %v225 = vunpack.c.l.b16 %v74
    %v226 = vunpack.c.l.b16 %v75
    %v227 = vunpack.c.l.b16 %v76
    %v228 = vunpack.c.l.b16 %v77
    %v229 = vunpack.c.l.b16 %v78
    %v230 = vunpack.c.l.b16 %v79
    %v231 = vunpack.c.l.b16 %v80
    %v232 = vunpack.c.l.b16 %v81
    %v233 = vunpack.c.l.b16 %v82
    %v234 = vunpack.c.l.b16 %v83
    %v235 = vunpack.c.l.b16 %v84
    %v236 = vunpack.c.l.b16 %v85
    %v237 = vunpack.c.l.b16 %v86
    %v238 = vunpack.c.l.b16 %v87
    %v239 = vunpack.c.l.b16 %v88
    %v240 = vunpack.c.l.b16 %v89
    %v241 = vunpack.c.l.b16 %v90
    %v242 = vpack.c.b16 %v179, %v178
    %v243 = vpack.c.b16 %v181, %v180
    %v244 = vpack.c.b16 %v183, %v182
    %v245 = vpack.c.b16 %v185, %v184
    %v246 = vpack.c.b16 %v187, %v186
    %v247 = vpack.c.b16 %v189, %v188
    %v248 = vpack.c.b16 %v191, %v190
    %v249 = vpack.c.b16 %v193, %v192
    %v250 = vpack.c.b16 %v195, %v194
    %v251 = vpack.c.b16 %v197, %v196
    %v252 = vpack.c.b16 %v199, %v198
    %v253 = vpack.c.b16 %v201, %v200
    %v254 = vpack.c.b16 %v203, %v202
    %v255 = vpack.c.b16 %v205, %v204
    %v256 = vpack.c.b16 %v207, %v206
    %v257 = vpack.c.b16 %v209, %v208
    %v258 = vpack.c.b16 %v211, %v210
    %v259 = vpack.c.b16 %v213, %v212
    %v260 = vpack.c.b16 %v215, %v214
    %v261 = vpack.c.b16 %v217, %v216
    %v262 = vpack.c.b16 %v219, %v218
    %v263 = vpack.c.b16 %v221, %v220
    %v264 = vpack.c.b16 %v223, %v222
    %v265 = vpack.c.b16 %v225, %v224
    %v266 = vpack.c.b16 %v227, %v226
    %v267 = vpack.c.b16 %v229, %v228
    %v268 = vpack.c.b16 %v231, %v230
    %v269 = vpack.c.b16 %v233, %v232
    %v270 = vpack.c.b16 %v235, %v234
    %v271 = vpack.c.b16 %v237, %v236
    %v272 = vpack.c.b16 %v239, %v238
    %v273 = vpack.c.b16 %v241, %v240
    %v322 = vunpack.c.l.b16 %v91
    %v323 = vunpack.c.l.b16 %v92
    %v324 = vunpack.c.l.b16 %v93
    %v325 = vunpack.c.l.b16 %v94
    %v326 = vunpack.c.l.b16 %v95
    %v327 = vunpack.c.l.b16 %v96
    %v328 = vunpack.c.l.b16 %v97
    %v329 = vunpack.c.l.b16 %v98
    %v330 = vunpack.c.l.b16 %v99
    %v331 = vunpack.c.l.b16 %v100
    %v332 = vunpack.c.l.b16 %v101
    %v333 = vunpack.c.l.b16 %v102
    %v334 = vunpack.c.l.b16 %v103
    %v335 = vunpack.c.l.b16 %v104
    %v336 = vunpack.c.l.b16 %v105
    %v337 = vunpack.c.l.b16 %v106
    %v338 = vpack.c.b16 %v323, %v322
    %v339 = vpack.c.b16 %v325, %v324
    %v340 = vpack.c.b16 %v327, %v326
    %v341 = vpack.c.b16 %v329, %v328
    %v342 = vpack.c.b16 %v331, %v330
    %v343 = vpack.c.b16 %v333, %v332
    %v344 = vpack.c.b16 %v335, %v334
    %v345 = vpack.c.b16 %v337, %v336
    %354 = vmatprep.subr.bf16.mxu0 0
    %355 = vmatpush1.bf16.msra.mxu0 %v338
    %356 = vmatprep.subr.bf16.mxu0 0
    %357 = vmatpush1.bf16.msra.mxu0 %v339
    %358 = vmatprep.subr.bf16.mxu0 0
    %359 = vmatpush1.bf16.msra.mxu0 %v340
    %360 = vmatprep.subr.bf16.mxu0 0
    %361 = vmatpush1.bf16.msra.mxu0 %v341
    %362 = vmatprep.subr.bf16.mxu0 0
    %363 = vmatpush1.bf16.msra.mxu0 %v342
    %364 = vmatprep.subr.bf16.mxu0 0
    %365 = vmatpush1.bf16.msra.mxu0 %v343
    %366 = vmatprep.subr.bf16.mxu0 0
    %367 = vmatpush1.bf16.msra.mxu0 %v344
    %368 = vmatprep.subr.bf16.mxu0 0
    %369 = vmatpush1.bf16.msra.mxu0 %v345
    %370 = vmatprep.subr.bf16.mxu0 0
    %371 = vmatpush1.bf16.msra.mxu0 0
    %372 = vmatprep.subr.bf16.mxu0 0
    %373 = vmatpush1.bf16.msra.mxu0 0
    %374 = vmatprep.subr.bf16.mxu0 0
    %375 = vmatpush1.bf16.msra.mxu0 0
    %376 = vmatprep.subr.bf16.mxu0 0
    %377 = vmatpush1.bf16.msra.mxu0 0
    %378 = vmatprep.subr.bf16.mxu0 0
    %379 = vmatpush1.bf16.msra.mxu0 0
    %380 = vmatprep.subr.bf16.mxu0 0
    %381 = vmatpush1.bf16.msra.mxu0 0
    %382 = vmatprep.subr.bf16.mxu0 0
    %383 = vmatpush1.bf16.msra.mxu0 0
    %384 = vmatprep.subr.bf16.mxu0 0
    %385 = vmatpush1.bf16.msra.mxu0 0
    %386 = vmatprep.mubr.bf16.mxu0 0
    %387 = vmatmul.mubr.bf16.gmra.mrb[0].mxu0 %v242
    %v388 = vpop.f32.mrb[0].mxu0
    %v389 = vadd.f32 %v112, %v388
    %v390 = vpop.f32.mrb[0].mxu0
    %v391 = vpop.f32.mrb[0].mxu0
    %v392 = vadd.f32 %v112, %v391
    %v393 = vpop.f32.mrb[0].mxu0
    %394 = vmatprep.mubr.bf16.mxu0 0
    %395 = vmatmul.mubr.bf16.gmra.mrb[0].mxu0 %v243
    %v396 = vpop.f32.mrb[0].mxu0
    %v397 = vadd.f32 %v112, %v396
    %v398 = vpop.f32.mrb[0].mxu0
    %v399 = vpop.f32.mrb[0].mxu0
    %v400 = vadd.f32 %v112, %v399
    %v401 = vpop.f32.mrb[0].mxu0
    %402 = vmatprep.mubr.bf16.mxu0 0
    %403 = vmatmul.mubr.bf16.gmra.mrb[0].mxu0 %v244
    %v404 = vpop.f32.mrb[0].mxu0
    %v405 = vadd.f32 %v112, %v404
    %v406 = vpop.f32.mrb[0].mxu0
    %v407 = vpop.f32.mrb[0].mxu0
    %v408 = vadd.f32 %v112, %v407
    %v409 = vpop.f32.mrb[0].mxu0
    %410 = vmatprep.mubr.bf16.mxu0 0
    %411 = vmatmul.mubr.bf16.gmra.mrb[0].mxu0 %v245
    %v412 = vpop.f32.mrb[0].mxu0
    %v413 = vadd.f32 %v112, %v412
    %v414 = vpop.f32.mrb[0].mxu0
    %v415 = vpop.f32.mrb[0].mxu0
    %v416 = vadd.f32 %v112, %v415
    %v417 = vpop.f32.mrb[0].mxu0
    %418 = vmatprep.mubr.bf16.mxu0 0
    %419 = vmatmul.mubr.bf16.gmra.mrb[0].mxu0 %v246
    %v420 = vpop.f32.mrb[0].mxu0
    %v421 = vadd.f32 %v112, %v420
    %v422 = vpop.f32.mrb[0].mxu0
    %v423 = vpop.f32.mrb[0].mxu0
    %v424 = vadd.f32 %v112, %v423
    %v425 = vpop.f32.mrb[0].mxu0
    %426 = vmatprep.mubr.bf16.mxu0 0
    %427 = vmatmul.mubr.bf16.gmra.mrb[0].mxu0 %v247
    %v428 = vpop.f32.mrb[0].mxu0
    %v429 = vadd.f32 %v112, %v428
    %v430 = vpop.f32.mrb[0].mxu0
    %v431 = vpop.f32.mrb[0].mxu0
    %v432 = vadd.f32 %v112, %v431
    %v433 = vpop.f32.mrb[0].mxu0
    %434 = vmatprep.mubr.bf16.mxu0 0
    %435 = vmatmul.mubr.bf16.gmra.mrb[0].mxu0 %v248
    %v436 = vpop.f32.mrb[0].mxu0
    %v437 = vadd.f32 %v112, %v436
    %v438 = vpop.f32.mrb[0].mxu0
    %v439 = vpop.f32.mrb[0].mxu0
    %v440 = vadd.f32 %v112, %v439
    %v441 = vpop.f32.mrb[0].mxu0
    %442 = vmatprep.mubr.bf16.mxu0 0
    %443 = vmatmul.mubr.bf16.gmra.mrb[0].mxu0 %v249
    %v444 = vpop.f32.mrb[0].mxu0
    %v445 = vadd.f32 %v112, %v444
    %v446 = vpop.f32.mrb[0].mxu0
    %v447 = vpop.f32.mrb[0].mxu0
    %v448 = vadd.f32 %v112, %v447
    %v449 = vpop.f32.mrb[0].mxu0
    %450 = vmatprep.mubr.bf16.mxu0 0
    %451 = vmatmul.mubr.bf16.gmra.mrb[0].mxu0 %v250
    %v452 = vpop.f32.mrb[0].mxu0
    %v453 = vadd.f32 %v112, %v452
    %v454 = vpop.f32.mrb[0].mxu0
    %v455 = vpop.f32.mrb[0].mxu0
    %v456 = vadd.f32 %v112, %v455
    %v457 = vpop.f32.mrb[0].mxu0
    %458 = vmatprep.mubr.bf16.mxu0 0
    %459 = vmatmul.mubr.bf16.gmra.mrb[0].mxu0 %v251
    %v460 = vpop.f32.mrb[0].mxu0
    %v461 = vadd.f32 %v112, %v460
    %v462 = vpop.f32.mrb[0].mxu0
    %v463 = vpop.f32.mrb[0].mxu0
    %v464 = vadd.f32 %v112, %v463
    %v465 = vpop.f32.mrb[0].mxu0
    %466 = vmatprep.mubr.bf16.mxu0 0
    %467 = vmatmul.mubr.bf16.gmra.mrb[0].mxu0 %v252
    %v468 = vpop.f32.mrb[0].mxu0
    %v469 = vadd.f32 %v112, %v468
    %v470 = vpop.f32.mrb[0].mxu0
    %v471 = vpop.f32.mrb[0].mxu0
    %v472 = vadd.f32 %v112, %v471
    %v473 = vpop.f32.mrb[0].mxu0
    %474 = vmatprep.mubr.bf16.mxu0 0
    %475 = vmatmul.mubr.bf16.gmra.mrb[0].mxu0 %v253
    %v476 = vpop.f32.mrb[0].mxu0
    %v477 = vadd.f32 %v112, %v476
    %v478 = vpop.f32.mrb[0].mxu0
    %v479 = vpop.f32.mrb[0].mxu0
    %v480 = vadd.f32 %v112, %v479
    %v481 = vpop.f32.mrb[0].mxu0
    %482 = vmatprep.mubr.bf16.mxu0 0
    %483 = vmatmul.mubr.bf16.gmra.mrb[0].mxu0 %v254
    %v484 = vpop.f32.mrb[0].mxu0
    %v485 = vadd.f32 %v112, %v484
    %v486 = vpop.f32.mrb[0].mxu0
    %v487 = vpop.f32.mrb[0].mxu0
    %v488 = vadd.f32 %v112, %v487
    %v489 = vpop.f32.mrb[0].mxu0
    %490 = vmatprep.mubr.bf16.mxu0 0
    %491 = vmatmul.mubr.bf16.gmra.mrb[0].mxu0 %v255
    %v492 = vpop.f32.mrb[0].mxu0
    %v493 = vadd.f32 %v112, %v492
    %v494 = vpop.f32.mrb[0].mxu0
    %v495 = vpop.f32.mrb[0].mxu0
    %v496 = vadd.f32 %v112, %v495
    %v497 = vpop.f32.mrb[0].mxu0
    %498 = vmatprep.mubr.bf16.mxu0 0
    %499 = vmatmul.mubr.bf16.gmra.mrb[0].mxu0 %v256
    %v500 = vpop.f32.mrb[0].mxu0
    %v501 = vadd.f32 %v112, %v500
    %v502 = vpop.f32.mrb[0].mxu0
    %v503 = vpop.f32.mrb[0].mxu0
    %v504 = vadd.f32 %v112, %v503
    %v505 = vpop.f32.mrb[0].mxu0
    %506 = vmatprep.mubr.bf16.mxu0 0
    %507 = vmatmul.mubr.bf16.gmra.mrb[0].mxu0 %v257
    %v508 = vpop.f32.mrb[0].mxu0
    %v509 = vadd.f32 %v112, %v508
    %v510 = vpop.f32.mrb[0].mxu0
    %v511 = vpop.f32.mrb[0].mxu0
    %v512 = vadd.f32 %v112, %v511
    %v513 = vpop.f32.mrb[0].mxu0
    %514 = vmatprep.mubr.bf16.mxu0 0
    %515 = vmatmul.mubr.bf16.gmra.mrb[0].mxu0 %v258
    %v516 = vpop.f32.mrb[0].mxu0
    %v517 = vadd.f32 %v112, %v516
    %v518 = vpop.f32.mrb[0].mxu0
    %v519 = vpop.f32.mrb[0].mxu0
    %v520 = vadd.f32 %v112, %v519
    %v521 = vpop.f32.mrb[0].mxu0
    %522 = vmatprep.mubr.bf16.mxu0 0
    %523 = vmatmul.mubr.bf16.gmra.mrb[0].mxu0 %v259
    %v524 = vpop.f32.mrb[0].mxu0
    %v525 = vadd.f32 %v112, %v524
    %v526 = vpop.f32.mrb[0].mxu0
    %v527 = vpop.f32.mrb[0].mxu0
    %v528 = vadd.f32 %v112, %v527
    %v529 = vpop.f32.mrb[0].mxu0
    %530 = vmatprep.mubr.bf16.mxu0 0
    %531 = vmatmul.mubr.bf16.gmra.mrb[0].mxu0 %v260
    %v532 = vpop.f32.mrb[0].mxu0
    %v533 = vadd.f32 %v112, %v532
    %v534 = vpop.f32.mrb[0].mxu0
    %v535 = vpop.f32.mrb[0].mxu0
    %v536 = vadd.f32 %v112, %v535
    %v537 = vpop.f32.mrb[0].mxu0
    %538 = vmatprep.mubr.bf16.mxu0 0
    %539 = vmatmul.mubr.bf16.gmra.mrb[0].mxu0 %v261
    %v540 = vpop.f32.mrb[0].mxu0
    %v541 = vadd.f32 %v112, %v540
    %v542 = vpop.f32.mrb[0].mxu0
    %v543 = vpop.f32.mrb[0].mxu0
    %v544 = vadd.f32 %v112, %v543
    %v545 = vpop.f32.mrb[0].mxu0
    %546 = vmatprep.mubr.bf16.mxu0 0
    %547 = vmatmul.mubr.bf16.gmra.mrb[0].mxu0 %v262
    %v548 = vpop.f32.mrb[0].mxu0
    %v549 = vadd.f32 %v112, %v548
    %v550 = vpop.f32.mrb[0].mxu0
    %v551 = vpop.f32.mrb[0].mxu0
    %v552 = vadd.f32 %v112, %v551
    %v553 = vpop.f32.mrb[0].mxu0
    %554 = vmatprep.mubr.bf16.mxu0 0
    %555 = vmatmul.mubr.bf16.gmra.mrb[0].mxu0 %v263
    %v556 = vpop.f32.mrb[0].mxu0
    %v557 = vadd.f32 %v112, %v556
    %v558 = vpop.f32.mrb[0].mxu0
    %v559 = vpop.f32.mrb[0].mxu0
    %v560 = vadd.f32 %v112, %v559
    %v561 = vpop.f32.mrb[0].mxu0
    %562 = vmatprep.mubr.bf16.mxu0 0
    %563 = vmatmul.mubr.bf16.gmra.mrb[0].mxu0 %v264
    %v564 = vpop.f32.mrb[0].mxu0
    %v565 = vadd.f32 %v112, %v564
    %v566 = vpop.f32.mrb[0].mxu0
    %v567 = vpop.f32.mrb[0].mxu0
    %v568 = vadd.f32 %v112, %v567
    %v569 = vpop.f32.mrb[0].mxu0
    %570 = vmatprep.mubr.bf16.mxu0 0
    %571 = vmatmul.mubr.bf16.gmra.mrb[0].mxu0 %v265
    %v572 = vpop.f32.mrb[0].mxu0
    %v573 = vadd.f32 %v112, %v572
    %v574 = vpop.f32.mrb[0].mxu0
    %v575 = vpop.f32.mrb[0].mxu0
    %v576 = vadd.f32 %v112, %v575
    %v577 = vpop.f32.mrb[0].mxu0
    %578 = vmatprep.mubr.bf16.mxu0 0
    %579 = vmatmul.mubr.bf16.gmra.mrb[0].mxu0 %v266
    %v580 = vpop.f32.mrb[0].mxu0
    %v581 = vadd.f32 %v112, %v580
    %v582 = vpop.f32.mrb[0].mxu0
    %v583 = vpop.f32.mrb[0].mxu0
    %v584 = vadd.f32 %v112, %v583
    %v585 = vpop.f32.mrb[0].mxu0
    %586 = vmatprep.mubr.bf16.mxu0 0
    %587 = vmatmul.mubr.bf16.gmra.mrb[0].mxu0 %v267
    %v588 = vpop.f32.mrb[0].mxu0
    %v589 = vadd.f32 %v112, %v588
    %v590 = vpop.f32.mrb[0].mxu0
    %v591 = vpop.f32.mrb[0].mxu0
    %v592 = vadd.f32 %v112, %v591
    %v593 = vpop.f32.mrb[0].mxu0
    %594 = vmatprep.mubr.bf16.mxu0 0
    %595 = vmatmul.mubr.bf16.gmra.mrb[0].mxu0 %v268
    %v596 = vpop.f32.mrb[0].mxu0
    %v597 = vadd.f32 %v112, %v596
    %v598 = vpop.f32.mrb[0].mxu0
    %v599 = vpop.f32.mrb[0].mxu0
    %v600 = vadd.f32 %v112, %v599
    %v601 = vpop.f32.mrb[0].mxu0
    %602 = vmatprep.mubr.bf16.mxu0 0
    %603 = vmatmul.mubr.bf16.gmra.mrb[0].mxu0 %v269
    %v604 = vpop.f32.mrb[0].mxu0
    %v605 = vadd.f32 %v112, %v604
    %v606 = vpop.f32.mrb[0].mxu0
    %v607 = vpop.f32.mrb[0].mxu0
    %v608 = vadd.f32 %v112, %v607
    %v609 = vpop.f32.mrb[0].mxu0
    %610 = vmatprep.mubr.bf16.mxu0 0
    %611 = vmatmul.mubr.bf16.gmra.mrb[0].mxu0 %v270
    %v612 = vpop.f32.mrb[0].mxu0
    %v613 = vadd.f32 %v112, %v612
    %v614 = vpop.f32.mrb[0].mxu0
    %v615 = vpop.f32.mrb[0].mxu0
    %v616 = vadd.f32 %v112, %v615
    %v617 = vpop.f32.mrb[0].mxu0
    %618 = vmatprep.mubr.bf16.mxu0 0
    %619 = vmatmul.mubr.bf16.gmra.mrb[0].mxu0 %v271
    %v620 = vpop.f32.mrb[0].mxu0
    %v621 = vadd.f32 %v112, %v620
    %v622 = vpop.f32.mrb[0].mxu0
    %v623 = vpop.f32.mrb[0].mxu0
    %v624 = vadd.f32 %v112, %v623
    %v625 = vpop.f32.mrb[0].mxu0
    %626 = vmatprep.mubr.bf16.mxu0 0
    %627 = vmatmul.mubr.bf16.gmra.mrb[0].mxu0 %v272
    %v628 = vpop.f32.mrb[0].mxu0
    %v629 = vadd.f32 %v112, %v628
    %v630 = vpop.f32.mrb[0].mxu0
    %v631 = vpop.f32.mrb[0].mxu0
    %v632 = vadd.f32 %v112, %v631
    %v633 = vpop.f32.mrb[0].mxu0
    %634 = vmatprep.mubr.bf16.mxu0 0
    %635 = vmatmul.mubr.bf16.gmra.mrb[0].mxu0 %v273
    %v636 = vpop.f32.mrb[0].mxu0
    %v637 = vadd.f32 %v112, %v636
    %v638 = vpop.f32.mrb[0].mxu0
    %v639 = vpop.f32.mrb[0].mxu0
    %v640 = vadd.f32 %v112, %v639
    %v641 = vpop.f32.mrb[0].mxu0
    %642 = vdwg.mxu0
    %v643 = vmax.f32 %v389, 0.0
    %v644 = vmax.f32 %v392, 0.0
    %v645 = vmax.f32 %v397, 0.0
    %v646 = vmax.f32 %v400, 0.0
    %v647 = vmax.f32 %v405, 0.0
    %v648 = vmax.f32 %v408, 0.0
    %v649 = vmax.f32 %v413, 0.0
    %v650 = vmax.f32 %v416, 0.0
    %v651 = vmax.f32 %v421, 0.0
    %v652 = vmax.f32 %v424, 0.0
    %v653 = vmax.f32 %v429, 0.0
    %v654 = vmax.f32 %v432, 0.0
    %v655 = vmax.f32 %v437, 0.0
    %v656 = vmax.f32 %v440, 0.0
    %v657 = vmax.f32 %v445, 0.0
    %v658 = vmax.f32 %v448, 0.0
    %v659 = vmax.f32 %v453, 0.0
    %v660 = vmax.f32 %v456, 0.0
    %v661 = vmax.f32 %v461, 0.0
    %v662 = vmax.f32 %v464, 0.0
    %v663 = vmax.f32 %v469, 0.0
    %v664 = vmax.f32 %v472, 0.0
    %v665 = vmax.f32 %v477, 0.0
    %v666 = vmax.f32 %v480, 0.0
    %v667 = vmax.f32 %v485, 0.0
    %v668 = vmax.f32 %v488, 0.0
    %v669 = vmax.f32 %v493, 0.0
    %v670 = vmax.f32 %v496, 0.0
    %v671 = vmax.f32 %v501, 0.0
    %v672 = vmax.f32 %v504, 0.0
    %v673 = vmax.f32 %v509, 0.0
    %v674 = vmax.f32 %v512, 0.0
    %v675 = vmax.f32 %v517, 0.0
    %v676 = vmax.f32 %v520, 0.0
    %v677 = vmax.f32 %v525, 0.0
    %v678 = vmax.f32 %v528, 0.0
    %v679 = vmax.f32 %v533, 0.0
    %v680 = vmax.f32 %v536, 0.0
    %v681 = vmax.f32 %v541, 0.0
    %v682 = vmax.f32 %v544, 0.0
    %v683 = vmax.f32 %v549, 0.0
    %v684 = vmax.f32 %v552, 0.0
    %v685 = vmax.f32 %v557, 0.0
    %v686 = vmax.f32 %v560, 0.0
    %v687 = vmax.f32 %v565, 0.0
    %v688 = vmax.f32 %v568, 0.0
    %v689 = vmax.f32 %v573, 0.0
    %v690 = vmax.f32 %v576, 0.0
    %v691 = vmax.f32 %v581, 0.0
    %v692 = vmax.f32 %v584, 0.0
    %v693 = vmax.f32 %v589, 0.0
    %v694 = vmax.f32 %v592, 0.0
    %v695 = vmax.f32 %v597, 0.0
    %v696 = vmax.f32 %v600, 0.0
    %v697 = vmax.f32 %v605, 0.0
    %v698 = vmax.f32 %v608, 0.0
    %v699 = vmax.f32 %v613, 0.0
    %v700 = vmax.f32 %v616, 0.0
    %v701 = vmax.f32 %v621, 0.0
    %v702 = vmax.f32 %v624, 0.0
    %v703 = vmax.f32 %v629, 0.0
    %v704 = vmax.f32 %v632, 0.0
    %v705 = vmax.f32 %v637, 0.0
    %v706 = vmax.f32 %v640, 0.0
    %v707 = vld [vmem:[%s3] sm:$0xf]
    %v708 = vpack.c.bf16 %v644, %v643
    %v709 = vpack.c.bf16 %v646, %v645
    %v710 = vpack.c.bf16 %v648, %v647
    %v711 = vpack.c.bf16 %v650, %v649
    %v712 = vpack.c.bf16 %v652, %v651
    %v713 = vpack.c.bf16 %v654, %v653
    %v714 = vpack.c.bf16 %v656, %v655
    %v715 = vpack.c.bf16 %v658, %v657
    %v716 = vpack.c.bf16 %v660, %v659
    %v717 = vpack.c.bf16 %v662, %v661
    %v718 = vpack.c.bf16 %v664, %v663
    %v719 = vpack.c.bf16 %v666, %v665
    %v720 = vpack.c.bf16 %v668, %v667
    %v721 = vpack.c.bf16 %v670, %v669
    %v722 = vpack.c.bf16 %v672, %v671
    %v723 = vpack.c.bf16 %v674, %v673
    %v724 = vpack.c.bf16 %v676, %v675
    %v725 = vpack.c.bf16 %v678, %v677
    %v726 = vpack.c.bf16 %v680, %v679
    %v727 = vpack.c.bf16 %v682, %v681
    %v728 = vpack.c.bf16 %v684, %v683
    %v729 = vpack.c.bf16 %v686, %v685
    %v730 = vpack.c.bf16 %v688, %v687
    %v731 = vpack.c.bf16 %v690, %v689
    %v732 = vpack.c.bf16 %v692, %v691
    %v733 = vpack.c.bf16 %v694, %v693
    %v734 = vpack.c.bf16 %v696, %v695
    %v735 = vpack.c.bf16 %v698, %v697
    %v736 = vpack.c.bf16 %v700, %v699
    %v737 = vpack.c.bf16 %v702, %v701
    %v738 = vpack.c.bf16 %v704, %v703
    %v739 = vpack.c.bf16 %v706, %v705
    %v742 = vunpack.c.l.s4 1966171168
    %v743 = vunpack.c.0.s8 %v742
    %v744 = vlaneseq
    %v745 = vshrl.u32 %v744, 7
    %v746 = vsub.s32 %v743, %v745
    %v747 = vrot.slane %v707, %v746
    %v748 = vcombine.high %v747, %v747
    %v750 = vunpack.c.l.s4 1966171168
    %v751 = vunpack.c.0.s8 %v750
    %v752 = vlaneseq
    %v753 = vshrl.u32 %v752, 7
    %v754 = vsub.s32 %v751, %v753
    %v755 = vrot.slane %v747, %v754
    %v757 = vunpack.c.l.s4 1966171168
    %v758 = vunpack.c.0.s8 %v757
    %v759 = vlaneseq
    %v760 = vshrl.u32 %v759, 7
    %v761 = vsub.s32 %v758, %v760
    %v762 = vrot.slane %v748, %v761
    %v763 = vcombine.high %v755, %v755
    %v764 = vcombine.high %v762, %v762
    %769 = vmatprep.subr.bf16.mxu0 0
    %770 = vmatpush1.bf16.msra.mxu0 %v708
    %771 = vmatprep.subr.bf16.mxu0 0
    %772 = vmatpush1.bf16.msra.mxu0 %v709
    %773 = vmatprep.subr.bf16.mxu0 0
    %774 = vmatpush1.bf16.msra.mxu0 %v710
    %775 = vmatprep.subr.bf16.mxu0 0
    %776 = vmatpush1.bf16.msra.mxu0 %v711
    %777 = vmatprep.subr.bf16.mxu0 0
    %778 = vmatpush1.bf16.msra.mxu0 %v712
    %779 = vmatprep.subr.bf16.mxu0 0
    %780 = vmatpush1.bf16.msra.mxu0 %v713
    %781 = vmatprep.subr.bf16.mxu0 0
    %782 = vmatpush1.bf16.msra.mxu0 %v714
    %783 = vmatprep.subr.bf16.mxu0 0
    %784 = vmatpush1.bf16.msra.mxu0 %v715
    %785 = vmatprep.subr.bf16.mxu0 0
    %786 = vmatpush1.bf16.msra.mxu0 %v716
    %787 = vmatprep.subr.bf16.mxu0 0
    %788 = vmatpush1.bf16.msra.mxu0 %v717
    %789 = vmatprep.subr.bf16.mxu0 0
    %790 = vmatpush1.bf16.msra.mxu0 %v718
    %791 = vmatprep.subr.bf16.mxu0 0
    %792 = vmatpush1.bf16.msra.mxu0 %v719
    %793 = vmatprep.subr.bf16.mxu0 0
    %794 = vmatpush1.bf16.msra.mxu0 %v720
    %795 = vmatprep.subr.bf16.mxu0 0
    %796 = vmatpush1.bf16.msra.mxu0 %v721
    %797 = vmatprep.subr.bf16.mxu0 0
    %798 = vmatpush1.bf16.msra.mxu0 %v722
    %799 = vmatprep.subr.bf16.mxu0 0
    %800 = vmatpush1.bf16.msra.mxu0 %v723
    %801 = vmatprep.mubr.bf16.mxu0 %v762
    %802 = vmatmul.mubr.bf16.gmra.mrb[0].mxu0 %v755
    %v803 = vpop.f32.mrb[0].mxu0
    %v804 = vadd.f32 0.0, %v803
    %v805 = vpop.f32.mrb[0].mxu0
    %v806 = vpop.f32.mrb[0].mxu0
    %v807 = vpop.f32.mrb[0].mxu0
    %808 = vdwg.mxu0
    %809 = vmatprep.subr.bf16.mxu0 0
    %810 = vmatpush1.bf16.msra.mxu0 %v724
    %811 = vmatprep.subr.bf16.mxu0 0
    %812 = vmatpush1.bf16.msra.mxu0 %v725
    %813 = vmatprep.subr.bf16.mxu0 0
    %814 = vmatpush1.bf16.msra.mxu0 %v726
    %815 = vmatprep.subr.bf16.mxu0 0
    %816 = vmatpush1.bf16.msra.mxu0 %v727
    %817 = vmatprep.subr.bf16.mxu0 0
    %818 = vmatpush1.bf16.msra.mxu0 %v728
    %819 = vmatprep.subr.bf16.mxu0 0
    %820 = vmatpush1.bf16.msra.mxu0 %v729
    %821 = vmatprep.subr.bf16.mxu0 0
    %822 = vmatpush1.bf16.msra.mxu0 %v730
    %823 = vmatprep.subr.bf16.mxu0 0
    %824 = vmatpush1.bf16.msra.mxu0 %v731
    %825 = vmatprep.subr.bf16.mxu0 0
    %826 = vmatpush1.bf16.msra.mxu0 %v732
    %827 = vmatprep.subr.bf16.mxu0 0
    %828 = vmatpush1.bf16.msra.mxu0 %v733
    %829 = vmatprep.subr.bf16.mxu0 0
    %830 = vmatpush1.bf16.msra.mxu0 %v734
    %831 = vmatprep.subr.bf16.mxu0 0
    %832 = vmatpush1.bf16.msra.mxu0 %v735
    %833 = vmatprep.subr.bf16.mxu0 0
    %834 = vmatpush1.bf16.msra.mxu0 %v736
    %835 = vmatprep.subr.bf16.mxu0 0
    %836 = vmatpush1.bf16.msra.mxu0 %v737
    %837 = vmatprep.subr.bf16.mxu0 0
    %838 = vmatpush1.bf16.msra.mxu0 %v738
    %839 = vmatprep.subr.bf16.mxu0 0
    %840 = vmatpush1.bf16.msra.mxu0 %v739
    %841 = vmatprep.mubr.bf16.mxu0 %v764
    %842 = vmatmul.mubr.bf16.gmra.mrb[0].mxu0 %v763
    %v843 = vpop.f32.mrb[0].mxu0
    %v844 = vadd.f32 %v804, %v843
    %v845 = vpop.f32.mrb[0].mxu0
    %v846 = vpop.f32.mrb[0].mxu0
    %v847 = vpop.f32.mrb[0].mxu0
    %848 = vdwg.mxu0
    %849 = vst [vmem:[#allocation2] sm:$0x3] %v844
    %v850 = vpack.c.bf16 %v844, %v844
    %v851 = vld [vmem:[%s4] sm:$0xf]
    %v852 = vld [vmem:[%s4 + $0x4] sm:$0xf]
    %v853 = vld [vmem:[%s4 + $0x8] sm:$0xf]
    %v854 = vld [vmem:[%s4 + $0xc] sm:$0xf]
    %v855 = vld [vmem:[%s4 + $0x10] sm:$0xf]
    %v856 = vld [vmem:[%s4 + $0x14] sm:$0xf]
    %v857 = vld [vmem:[%s4 + $0x18] sm:$0xf]
    %v858 = vld [vmem:[%s4 + $0x1c] sm:$0xf]
    %v859 = vld [vmem:[%s4 + $0x20] sm:$0xf]
    %v860 = vld [vmem:[%s4 + $0x24] sm:$0xf]
    %v861 = vld [vmem:[%s4 + $0x28] sm:$0xf]
    %v862 = vld [vmem:[%s4 + $0x2c] sm:$0xf]
    %v863 = vld [vmem:[%s4 + $0x30] sm:$0xf]
    %v864 = vld [vmem:[%s4 + $0x34] sm:$0xf]
    %v865 = vld [vmem:[%s4 + $0x38] sm:$0xf]
    %v866 = vld [vmem:[%s4 + $0x3c] sm:$0xf]
    %v867 = vld [vmem:[%s5] sm:$0x1]
    %v869 = vlaneseq
    %v870 = vshrl.u32 %v869, 7
    %v871 = vsub.s32 0, %v870
    %v872 = vrot.slane %v867, %v871
    %v890 = vunpack.c.l.b16 %v851
    %v891 = vunpack.c.l.b16 %v852
    %v892 = vunpack.c.l.b16 %v853
    %v893 = vunpack.c.l.b16 %v854
    %v894 = vunpack.c.l.b16 %v855
    %v895 = vunpack.c.l.b16 %v856
    %v896 = vunpack.c.l.b16 %v857
    %v897 = vunpack.c.l.b16 %v858
    %v898 = vunpack.c.l.b16 %v859
    %v899 = vunpack.c.l.b16 %v860
    %v900 = vunpack.c.l.b16 %v861
    %v901 = vunpack.c.l.b16 %v862
    %v902 = vunpack.c.l.b16 %v863
    %v903 = vunpack.c.l.b16 %v864
    %v904 = vunpack.c.l.b16 %v865
    %v905 = vunpack.c.l.b16 %v866
    %v906 = vpack.c.b16 %v891, %v890
    %v907 = vpack.c.b16 %v893, %v892
    %v908 = vpack.c.b16 %v895, %v894
    %v909 = vpack.c.b16 %v897, %v896
    %v910 = vpack.c.b16 %v899, %v898
    %v911 = vpack.c.b16 %v901, %v900
    %v912 = vpack.c.b16 %v903, %v902
    %v913 = vpack.c.b16 %v905, %v904
    %922 = vmatprep.subr.bf16.mxu0 0
    %923 = vmatpush1.bf16.msra.mxu0 %v906
    %924 = vmatprep.subr.bf16.mxu0 0
    %925 = vmatpush1.bf16.msra.mxu0 %v907
    %926 = vmatprep.subr.bf16.mxu0 0
    %927 = vmatpush1.bf16.msra.mxu0 %v908
    %928 = vmatprep.subr.bf16.mxu0 0
    %929 = vmatpush1.bf16.msra.mxu0 %v909
    %930 = vmatprep.subr.bf16.mxu0 0
    %931 = vmatpush1.bf16.msra.mxu0 %v910
    %932 = vmatprep.subr.bf16.mxu0 0
    %933 = vmatpush1.bf16.msra.mxu0 %v911
    %934 = vmatprep.subr.bf16.mxu0 0
    %935 = vmatpush1.bf16.msra.mxu0 %v912
    %936 = vmatprep.subr.bf16.mxu0 0
    %937 = vmatpush1.bf16.msra.mxu0 %v913
    %938 = vmatprep.subr.bf16.mxu0 0
    %939 = vmatpush1.bf16.msra.mxu0 0
    %940 = vmatprep.subr.bf16.mxu0 0
    %941 = vmatpush1.bf16.msra.mxu0 0
    %942 = vmatprep.subr.bf16.mxu0 0
    %943 = vmatpush1.bf16.msra.mxu0 0
    %944 = vmatprep.subr.bf16.mxu0 0
    %945 = vmatpush1.bf16.msra.mxu0 0
    %946 = vmatprep.subr.bf16.mxu0 0
    %947 = vmatpush1.bf16.msra.mxu0 0
    %948 = vmatprep.subr.bf16.mxu0 0
    %949 = vmatpush1.bf16.msra.mxu0 0
    %950 = vmatprep.subr.bf16.mxu0 0
    %951 = vmatpush1.bf16.msra.mxu0 0
    %952 = vmatprep.subr.bf16.mxu0 0
    %953 = vmatpush1.bf16.msra.mxu0 0
    %954 = vmatprep.mubr.bf16.mxu0 0
    %955 = vmatmul.mubr.bf16.gmra.mrb[0].mxu0 %v850
    %v956 = vpop.f32.mrb[0].mxu0
    %v957 = vadd.f32 %v872, %v956
    %v958 = vpop.f32.mrb[0].mxu0
    %v959 = vpop.f32.mrb[0].mxu0
    %v960 = vpop.f32.mrb[0].mxu0
    %961 = vdwg.mxu0
    %962 = vst [vmem:[%s7] sm:$0x3] %v957
    // Predicated region
    $region26: #{base_model_forward.1} parent=1 // pred_check
      _
    $region27: #{base_model_forward.1} parent=1 // pred_check_branch
      %964 = sbr.rel (0) target = $region29
    $region28: #{base_model_forward.1} parent=1 // pred_region
      %s966 = ssub.s32 32, 32
      %967 = vsyncadd [#allocation3], %s966
      %s969 = sshll.u32 [#allocation2], 4
      %s970 = int_to_ptr.vmem [resolvable:$true] %s969
      %972 = dma.vmem_to_hbm [thread:$0]  %s970, 32, %s6, [#allocation3]
    $region29: #{base_model_forward.1} parent=1 // pred_fallthru
      _
    // Predicated region
    $region30: #{base_model_forward.1} parent=1 // pred_check
      _
    $region31: #{base_model_forward.1} parent=1 // pred_check_branch
      %974 = sbr.rel (0) target = $region33
    $region32: #{base_model_forward.1} parent=1 // pred_region
      _
    $region33: #{base_model_forward.1} parent=1 // pred_fallthru
      _
    // Predicated region
    $region34: #{base_model_forward.1} parent=1 // pred_check
      _
    $region35: #{base_model_forward.1} parent=1 // pred_check_branch
      %976 = sbr.rel (0) target = $region37
    $region36: #{base_model_forward.1} parent=1 // pred_region
      %977 = dma.done [#allocation3], 32
    $region37: #{base_model_forward.1} parent=1 // pred_fallthru
      _
    // Predicated region
    $region38: #{base_model_forward.1} parent=1 // pred_check
      _
    $region39: #{base_model_forward.1} parent=1 // pred_check_branch
      %979 = sbr.rel (0) target = $region41
    $region40: #{base_model_forward.1} parent=1 // pred_region
      _
    $region41: #{base_model_forward.1} parent=1 // pred_fallthru
      _
    %980 = vsyncpa [#allocation3], 1

</llo_original>
